<compile_context>
chip_gen: v7x
topology: tpu7x:2x2x1
jax: 0.10.0
libtpu: 0.0.40
codegen_flags: <defaults>
</compile_context>

<pallas_src>
import functools

import jax
import jax.numpy as jnp
from jax import lax
from jax.experimental import pallas as pl
from jax.experimental.pallas import tpu as pltpu


def _local_resblock_kernel(x_ref, w_ref, b_ref, mask_ref, out_ref, *,
                           width, color_channels, compute_dtype):
    # x_ref:    (1, Cin, S)       flat-spatial NCHW input tile (S = H*W on lanes)
    # w_ref:    (Cout, 9*Cin)     im2col-ordered conv weights (t = dy*3+dx major)
    # b_ref:    (Cout, 1)         conv bias (f32)
    # mask_ref: (3, S)            row-edge validity masks for dx = 0, 1, 2
    # out_ref:  (1, Cout, S)      flat-spatial NCHW output tile
    Cin = x_ref.shape[1]
    Cout = out_ref.shape[1]
    S = out_ref.shape[2]
    W = width
    C = color_channels
    P = W + 1  # max |flat tap offset| for a 3x3 kernel

    x_f32 = x_ref[0].astype(jnp.float32)          # (Cin, S) — residual path
    x_cmp = x_f32.astype(compute_dtype)           # matmul-operand dtype
    masks = mask_ref[...].astype(compute_dtype)   # (3, S)

    # Zero halo built in VMEM/vregs (no HBM-materialized padded copy).
    zpad = jnp.zeros((Cin, P), dtype=compute_dtype)
    xe = jnp.concatenate([zpad, x_cmp, zpad], axis=1)   # (Cin, S + 2P)

    # im2col: 9 lane-shifted views, masked at row edges, stacked on sublanes.
    pieces = []
    for dy in range(3):
        for dx in range(3):
            off = (dy - 1) * W + (dx - 1)
            piece = xe[:, P + off: P + off + S]          # (Cin, S) lane shift
            if dx != 1:                                  # mask cross-row wrap
                piece = piece * masks[dx:dx + 1, :]
            pieces.append(piece)
    patches = jnp.concatenate(pieces, axis=0)            # (9*Cin, S)

    # Single MXU matmul: (Cout, 9*Cin) @ (9*Cin, S), f32 accumulation.
    acc = jnp.dot(w_ref[...].astype(compute_dtype), patches,
                  preferred_element_type=jnp.float32)    # (Cout, S)
    acc = acc + b_ref[...]                               # (Cout, 1) broadcast

    # Mask-based epilogue (no channel slicing / concatenation).
    row = lax.broadcasted_iota(jnp.int32, (Cout, S), 0)
    is_color = row < C
    if Cin >= Cout:
        res = x_f32[:Cout, :]                            # rows >= C are discarded
    else:
        res = jnp.concatenate(
            [x_f32, jnp.zeros((Cout - Cin, S), jnp.float32)], axis=0)
    y_color = jnp.tanh(acc) + res
    y_feat = jnp.where(acc >= 0, acc, 0.01 * acc)        # leaky_relu(0.01)
    out_ref[0, :, :] = jnp.where(is_color, y_color, y_feat).astype(out_ref.dtype)


def local_res_block(x_nchw, weight_hwio, bias, color_channels=3, *,
                    compute_dtype=jnp.float32):
    """x_nchw: (B, Cin, H, W).  weight_hwio: (3, 3, Cin, Cout).  bias: (Cout,).

    Returns (B, Cout, H, W), same dtype as x.  Set compute_dtype=jnp.bfloat16 on
    v6e/v7x for faster matmuls (accumulation stays f32).
    """
    B, Cin, H, W = x_nchw.shape
    kh, kw, wcin, Cout = weight_hwio.shape
    assert (kh, kw) == (3, 3) and wcin == Cin
    C = color_channels
    assert Cin >= C and Cout >= C
    S = H * W

    # Free contiguous reshape — no transpose, no padded HBM copy of the input.
    x_flat = x_nchw.reshape(B, Cin, S)

    # (3,3,Cin,Cout) -> (Cout, 9*Cin), flattened row-major over (dy, dx, ci).
    w_mat = jnp.transpose(weight_hwio, (3, 0, 1, 2)).reshape(Cout, 9 * Cin)
    b_col = bias.reshape(Cout, 1).astype(jnp.float32)

    # Row-edge validity masks for the three horizontal taps (dx = 0, 1, 2).
    wpos = jnp.arange(S, dtype=jnp.int32) % W
    col_masks = jnp.stack([
        (wpos >= 1).astype(jnp.float32),        # dx offset = -1
        jnp.ones((S,), jnp.float32),            # dx offset =  0
        (wpos <= W - 2).astype(jnp.float32),    # dx offset = +1
    ], axis=0)                                  # (3, S)

    kernel = functools.partial(
        _local_resblock_kernel, width=W, color_channels=C,
        compute_dtype=compute_dtype)

    out_flat = pl.pallas_call(
        kernel,
        out_shape=jax.ShapeDtypeStruct((B, Cout, S), x_nchw.dtype),
        grid_spec=pltpu.PrefetchScalarGridSpec(
            num_scalar_prefetch=0,
            grid=(B,),
            in_specs=[
                pl.BlockSpec((1, Cin, S), lambda b: (b, 0, 0)),
                pl.BlockSpec((Cout, 9 * Cin), lambda b: (0, 0)),   # grid-invariant
                pl.BlockSpec((Cout, 1), lambda b: (0, 0)),         # grid-invariant
                pl.BlockSpec((3, S), lambda b: (0, 0)),            # grid-invariant
            ],
            out_specs=pl.BlockSpec((1, Cout, S), lambda b: (b, 0, 0)),
        ),
        compiler_params=pltpu.CompilerParams(
            dimension_semantics=("parallel",),
            vmem_limit_bytes=32 * 1024 * 1024,
        ),
    )(x_flat, w_mat, b_col, col_masks)

    # Free contiguous reshape back to NCHW.
    return out_flat.reshape(B, Cout, H, W)


def _reference(x_nchw, weight_hwio, bias, color_channels=3):
    """Pure-JAX reference (XLA conv) for correctness checking."""
    C = color_channels
    x_nhwc = jnp.transpose(x_nchw, (0, 2, 3, 1))
    y = lax.conv_general_dilated(
        x_nhwc, weight_hwio, window_strides=(1, 1), padding="SAME",
        dimension_numbers=("NHWC", "HWIO", "NHWC")) + bias
    y_c = jnp.tanh(y[..., :C]) + x_nhwc[..., :C]
    y_f_raw = y[..., C:]
    y_f = jnp.where(y_f_raw >= 0, y_f_raw, 0.01 * y_f_raw)
    out = jnp.concatenate([y_c, y_f], axis=-1)
    return jnp.transpose(out, (0, 3, 1, 2))


if __name__ == "__main__":
    B, Cin, Cout, C, H, W = 2, 8, 8, 3, 16, 16

    key = jax.random.PRNGKey(0)
    kx, kw, kb = jax.random.split(key, 3)
    x = jax.random.normal(kx, (B, Cin, H, W), dtype=jnp.float32)
    fan_in = 3 * 3 * Cin
    weight = jax.random.normal(kw, (3, 3, Cin, Cout), dtype=jnp.float32) / jnp.sqrt(fan_in)
    bias = 0.01 * jax.random.normal(kb, (Cout,), dtype=jnp.float32)

    out = jax.block_until_ready(local_res_block(x, weight, bias, color_channels=C))
    ref = jax.block_until_ready(_reference(x, weight, bias, color_channels=C))

    assert out.shape == (B, Cout, H, W)
    assert jnp.allclose(out, ref, atol=1e-5, rtol=1e-5), "mismatch vs reference"

    print("KERNEL_OK")
</pallas_src>

<mosaic_0001>
module attributes {stable_mosaic.version = 11 : i64} {
  func.func @_local_resblock_kernel(%arg0: i32, %arg1: memref<1x8x256xf32, #tpu.memory_space<vmem>>, %arg2: memref<8x72xf32, #tpu.memory_space<vmem>>, %arg3: memref<8x1xf32, #tpu.memory_space<vmem>>, %arg4: memref<3x256xf32, #tpu.memory_space<vmem>>, %arg5: memref<1x8x256xf32, #tpu.memory_space<vmem>>) attributes {dimension_semantics = [#tpu.dimension_semantics<parallel>], iteration_bounds = array<i64: 2>, scalar_prefetch = 0 : i64, scratch_operands = 0 : i64, tpu.core_type = #tpu.core_type<tc>, window_params = [{transform_indices = @transform_0, window_bounds = array<i64: 1, 8, 256>}, {pipeline_mode = #tpu.pipeline_mode<synchronous>, transform_indices = @transform_1, window_bounds = array<i64: 8, 72>}, {pipeline_mode = #tpu.pipeline_mode<synchronous>, transform_indices = @transform_2, window_bounds = array<i64: 8, 1>}, {pipeline_mode = #tpu.pipeline_mode<synchronous>, transform_indices = @transform_3, window_bounds = array<i64: 3, 256>}, {transform_indices = @transform_4, window_bounds = array<i64: 1, 8, 256>}]} {
    %c0 = arith.constant 0 : index
    %c0_0 = arith.constant 0 : index
    %c0_1 = arith.constant 0 : index
    %0 = vector.load %arg1[%c0, %c0_0, %c0_1] : memref<1x8x256xf32, #tpu.memory_space<vmem>>, vector<1x8x256xf32>
    %1 = vector.shape_cast %0 : vector<1x8x256xf32> to vector<8x256xf32>
    %c0_2 = arith.constant 0 : index
    %c0_3 = arith.constant 0 : index
    %2 = vector.load %arg4[%c0_2, %c0_3] : memref<3x256xf32, #tpu.memory_space<vmem>>, vector<3x256xf32>
    %cst = arith.constant 0.000000e+00 : f32
    %3 = vector.broadcast %cst : f32 to vector<8x17xf32>
    %4 = tpu.concatenate %3, %1, %3 in 1 : vector<8x17xf32>, vector<8x256xf32>, vector<8x17xf32> -> vector<8x290xf32>
    %5 = vector.extract_strided_slice %4 {offsets = [0, 0], sizes = [8, 256], strides = [1, 1]} : vector<8x290xf32> to vector<8x256xf32>
    %6 = vector.extract_strided_slice %2 {offsets = [0, 0], sizes = [1, 256], strides = [1, 1]} : vector<3x256xf32> to vector<1x256xf32>
    %7 = vector.broadcast %6 : vector<1x256xf32> to vector<8x256xf32>
    %8 = arith.mulf %5, %7 : vector<8x256xf32>
    %9 = vector.extract_strided_slice %4 {offsets = [0, 1], sizes = [8, 256], strides = [1, 1]} : vector<8x290xf32> to vector<8x256xf32>
    %10 = vector.extract_strided_slice %4 {offsets = [0, 2], sizes = [8, 256], strides = [1, 1]} : vector<8x290xf32> to vector<8x256xf32>
    %11 = vector.extract_strided_slice %2 {offsets = [2, 0], sizes = [1, 256], strides = [1, 1]} : vector<3x256xf32> to vector<1x256xf32>
    %12 = vector.broadcast %11 : vector<1x256xf32> to vector<8x256xf32>
    %13 = arith.mulf %10, %12 : vector<8x256xf32>
    %14 = vector.extract_strided_slice %4 {offsets = [0, 16], sizes = [8, 256], strides = [1, 1]} : vector<8x290xf32> to vector<8x256xf32>
    %15 = vector.extract_strided_slice %2 {offsets = [0, 0], sizes = [1, 256], strides = [1, 1]} : vector<3x256xf32> to vector<1x256xf32>
    %16 = vector.broadcast %15 : vector<1x256xf32> to vector<8x256xf32>
    %17 = arith.mulf %14, %16 : vector<8x256xf32>
    %18 = vector.extract_strided_slice %4 {offsets = [0, 17], sizes = [8, 256], strides = [1, 1]} : vector<8x290xf32> to vector<8x256xf32>
    %19 = vector.extract_strided_slice %4 {offsets = [0, 18], sizes = [8, 256], strides = [1, 1]} : vector<8x290xf32> to vector<8x256xf32>
    %20 = vector.extract_strided_slice %2 {offsets = [2, 0], sizes = [1, 256], strides = [1, 1]} : vector<3x256xf32> to vector<1x256xf32>
    %21 = vector.broadcast %20 : vector<1x256xf32> to vector<8x256xf32>
    %22 = arith.mulf %19, %21 : vector<8x256xf32>
    %23 = vector.extract_strided_slice %4 {offsets = [0, 32], sizes = [8, 256], strides = [1, 1]} : vector<8x290xf32> to vector<8x256xf32>
    %24 = vector.extract_strided_slice %2 {offsets = [0, 0], sizes = [1, 256], strides = [1, 1]} : vector<3x256xf32> to vector<1x256xf32>
    %25 = vector.broadcast %24 : vector<1x256xf32> to vector<8x256xf32>
    %26 = arith.mulf %23, %25 : vector<8x256xf32>
    %27 = vector.extract_strided_slice %4 {offsets = [0, 33], sizes = [8, 256], strides = [1, 1]} : vector<8x290xf32> to vector<8x256xf32>
    %28 = vector.extract_strided_slice %4 {offsets = [0, 34], sizes = [8, 256], strides = [1, 1]} : vector<8x290xf32> to vector<8x256xf32>
    %29 = vector.extract_strided_slice %2 {offsets = [2, 0], sizes = [1, 256], strides = [1, 1]} : vector<3x256xf32> to vector<1x256xf32>
    %30 = vector.broadcast %29 : vector<1x256xf32> to vector<8x256xf32>
    %31 = arith.mulf %28, %30 : vector<8x256xf32>
    %32 = tpu.concatenate %8, %9, %13, %17, %18, %22, %26, %27, %31 in 0 : vector<8x256xf32>, vector<8x256xf32>, vector<8x256xf32>, vector<8x256xf32>, vector<8x256xf32>, vector<8x256xf32>, vector<8x256xf32>, vector<8x256xf32>, vector<8x256xf32> -> vector<72x256xf32>
    %c0_4 = arith.constant 0 : index
    %c0_5 = arith.constant 0 : index
    %33 = vector.load %arg2[%c0_4, %c0_5] : memref<8x72xf32, #tpu.memory_space<vmem>>, vector<8x72xf32>
    %cst_6 = arith.constant dense<0.000000e+00> : vector<8x256xf32>
    %34 = tpu.matmul %33, %32, %cst_6 {dimension_numbers = #tpu.dot_dimension_numbers<[1], [0], [0], [1], [0, 0, 1, 1], [], []>} : vector<8x72xf32>, vector<72x256xf32>, vector<8x256xf32> -> vector<8x256xf32>
    %c0_7 = arith.constant 0 : index
    %c0_8 = arith.constant 0 : index
    %35 = vector.load %arg3[%c0_7, %c0_8] : memref<8x1xf32, #tpu.memory_space<vmem>>, vector<8x1xf32>
    %36 = vector.broadcast %35 : vector<8x1xf32> to vector<8x256xf32>
    %37 = arith.addf %34, %36 : vector<8x256xf32>
    %38 = tpu.iota {dimensions = array<i32: 0>} : vector<8x256xi32>
    %c3_i32 = arith.constant 3 : i32
    %39 = vector.broadcast %c3_i32 : i32 to vector<8x256xi32>
    %40 = arith.cmpi slt, %38, %39 : vector<8x256xi32>
    %41 = math.tanh %37 : vector<8x256xf32>
    %42 = arith.addf %41, %1 : vector<8x256xf32>
    %cst_9 = arith.constant 0.000000e+00 : f32
    %43 = vector.broadcast %cst_9 : f32 to vector<8x256xf32>
    %44 = arith.cmpf oge, %37, %43 : vector<8x256xf32>
    %cst_10 = arith.constant 0.00999999977 : f32
    %45 = vector.broadcast %cst_10 : f32 to vector<8x256xf32>
    %46 = arith.mulf %45, %37 : vector<8x256xf32>
    %47 = arith.select %44, %37, %46 : vector<8x256xi1>, vector<8x256xf32>
    %48 = arith.select %40, %42, %47 : vector<8x256xi1>, vector<8x256xf32>
    %c0_11 = arith.constant 0 : index
    %c0_12 = arith.constant 0 : index
    %c0_13 = arith.constant 0 : index
    %49 = vector.load %arg5[%c0_11, %c0_12, %c0_13] : memref<1x8x256xf32, #tpu.memory_space<vmem>>, vector<1x8x256xf32>
    %50 = vector.shape_cast %49 : vector<1x8x256xf32> to vector<8x256xf32>
    %51 = vector.shape_cast %48 : vector<8x256xf32> to vector<1x8x256xf32>
    tpu.vector_store %arg5[%c0_11, %c0_12, %c0_13], %51 {strides = array<i32>} : memref<1x8x256xf32, #tpu.memory_space<vmem>>, vector<1x8x256xf32>,
    return
  }
  func.func @transform_0(%arg0: i32) -> (i32, i32, i32) {
    %c0_i32 = arith.constant 0 : i32
    %c0_i32_0 = arith.constant 0 : i32
    %c0_i32_1 = arith.constant 0 : i32
    return %arg0, %c0_i32, %c0_i32_0 : i32, i32, i32
  }
  func.func @transform_1(%arg0: i32) -> (i32, i32) {
    %c0_i32 = arith.constant 0 : i32
    %c0_i32_0 = arith.constant 0 : i32
    %c0_i32_1 = arith.constant 0 : i32
    return %c0_i32, %c0_i32_0 : i32, i32
  }
  func.func @transform_2(%arg0: i32) -> (i32, i32) {
    %c0_i32 = arith.constant 0 : i32
    %c0_i32_0 = arith.constant 0 : i32
    %c0_i32_1 = arith.constant 0 : i32
    return %c0_i32, %c0_i32_0 : i32, i32
  }
  func.func @transform_3(%arg0: i32) -> (i32, i32) {
    %c0_i32 = arith.constant 0 : i32
    %c0_i32_0 = arith.constant 0 : i32
    %c0_i32_1 = arith.constant 0 : i32
    return %c0_i32, %c0_i32_0 : i32, i32
  }
  func.func @transform_4(%arg0: i32) -> (i32, i32, i32) {
    %c0_i32 = arith.constant 0 : i32
    %c0_i32_0 = arith.constant 0 : i32
    %c0_i32_1 = arith.constant 0 : i32
    return %arg0, %c0_i32, %c0_i32_0 : i32, i32, i32
  }
}

</mosaic_0001>

<llo_original>
// kernel: tpu_custom_call.1
$region0: #{tpu_custom_call.1}
  #allocation0 [shape = 'u32[]', space=smem, size = 0x4, offset = 0x4, fixed_abs, tag = 'smem constant byte address 0x4 - core index']
  #allocation1 [shape = 'u32[144,128]{1,0:T(1,128)}', space=vmem, size = 0x12000, scoped, tag = 'internal scratch']
  %s0 = inlined_call_operand.hbm [shape: f32[2,8,256], index: 0, kind: input, shape index: {}]
  %s1 = inlined_call_operand.vmem [shape: f32[8,72], index: 1, kind: input, shape index: {}]
  %s2 = inlined_call_operand.vmem [shape: f32[8,1], index: 2, kind: input, shape index: {}]
  %s3 = inlined_call_operand.vmem [shape: f32[3,256], index: 3, kind: input, shape index: {}]
  %s4 = inlined_call_operand.hbm [shape: f32[2,8,256], index: 4, kind: output, shape index: {}]
  %s5 = sld [smem:[#allocation0]]
  $region53: #{tpu_custom_call.1} parent=0
    _
  %s7 = ssub.s32 1, %s5
  %s8 = scalar_select 0, %s7, %s5
  $region1: #{tpu_custom_call.1} parent=0
    #allocation2 [shape = 'u8[16384]{0}', space=vmem, size = 0x4000, scoped, tag = 'input window, operand 0']
    #allocation3 [shape = 's32[2]{0}', space=sflag, size = 0x8, scoped, tag = 'scoped memory for tpu_custom_call.1']
    #allocation4 [shape = 's32[2]{0}', space=sflag, size = 0x8, scoped, tag = 'scoped memory for tpu_custom_call.1']
    #allocation5 [shape = 'u8[16384]{0}', space=vmem, size = 0x4000, scoped, tag = 'output window, operand 0']
    %9 = vsyncpa [#allocation3], 0
    %s10 = scalar_lea.sflag [#allocation3], 1
    %11 = vsyncpa %s10, 0
    %12 = vsyncpa [#allocation4], 0
    %s13 = scalar_lea.sflag [#allocation4], 1
    %14 = vsyncpa %s13, 0
    loop: start=0, step=1, limit=4
    $region2: #{tpu_custom_call.1} parent=1 // loop_pre_header
      _
    $region3: #{tpu_custom_call.1} parent=1 // loop_header
      %s16 = sphi 0, %s20
      %p17 = scmp.ge.s32.totalorder %s16, 4
      %s26 = sphi 0, %s28
      %s29 = sphi 0, %s26
      %s30 = sphi 0, %s29
      %s46 = sphi 0, %s30
      %s50 = sphi 0, %s50
      %s52 = sphi 0, %s50
      %s53 = sphi 0, %s52
      %s67 = sphi 0, %s53
      %s71 = sphi 0, %s71
      %s73 = sphi 0, %s71
      %s74 = sphi 0, %s73
      %s88 = sphi 0, %s74
      %s92 = sphi 0, %s92
      %s94 = sphi 0, %s92
      %s95 = sphi 0, %s94
      %s109 = sphi 0, %s95
      %s115 = sphi 0, %s117
      %s118 = sphi 0, %s115
      %s119 = sphi 0, %s118
      %s135 = sphi 0, %s119
    $region4: #{tpu_custom_call.1} parent=1 // loop_header_branch
      %19 = sbr.rel (%p17) target = $region8
    $region5: #{tpu_custom_call.1} parent=1 // loop_body
      %s21 = ssub.s32 %s16, 1
      %s22 = ssub.s32 %s16, 2
      %s23 = sadd.s32 %s16, 1
      %s24 = ssub.s32 %s16, %s23
      %p25 = scmp.eq.s32.totalorder %s24, 0
      %s27 = sadd.s32 %s26, 1
      %s28 = scalar_select %p25, %s26, %s27
      %p31 = pneg %p25
      %p32 = scmp.eq.s32.totalorder %s16, 1
      %p33 = por %p31, %p32
      %p34 = scmp.ne.s32.totalorder %s26, %s29
      %p35 = scmp.eq.s32.totalorder %s16, 0
      %p36 = por %p34, %p35
      %p37 = scmp.ne.s32.totalorder %s26, %s29
      %p38 = scmp.eq.s32.totalorder %s21, 1
      %p39 = por %p37, %p38
      %p40 = scmp.ne.s32.totalorder %s29, %s30
      %p41 = scmp.eq.s32.totalorder %s21, 0
      %p42 = por %p40, %p41
      %p43 = scmp.ne.s32.totalorder %s29, %s30
      %p44 = scmp.eq.s32.totalorder %s22, 1
      %p45 = por %p43, %p44
      %p47 = scmp.ne.s32.totalorder %s30, %s46
      %p48 = scmp.eq.s32.totalorder %s22, 0
      %p49 = por %p47, %p48
      %s51 = sadd.s32 %s50, 1
      %p54 = scmp.eq.s32.totalorder %s16, 1
      %p55 = scmp.ne.s32.totalorder %s50, %s52
      %p56 = scmp.eq.s32.totalorder %s16, 0
      %p57 = por %p55, %p56
      %p58 = scmp.ne.s32.totalorder %s50, %s52
      %p59 = scmp.eq.s32.totalorder %s21, 1
      %p60 = por %p58, %p59
      %p61 = scmp.ne.s32.totalorder %s52, %s53
      %p62 = scmp.eq.s32.totalorder %s21, 0
      %p63 = por %p61, %p62
      %p64 = scmp.ne.s32.totalorder %s52, %s53
      %p65 = scmp.eq.s32.totalorder %s22, 1
      %p66 = por %p64, %p65
      %p68 = scmp.ne.s32.totalorder %s53, %s67
      %p69 = scmp.eq.s32.totalorder %s22, 0
      %p70 = por %p68, %p69
      %s72 = sadd.s32 %s71, 1
      %p75 = scmp.eq.s32.totalorder %s16, 1
      %p76 = scmp.ne.s32.totalorder %s71, %s73
      %p77 = scmp.eq.s32.totalorder %s16, 0
      %p78 = por %p76, %p77
      %p79 = scmp.ne.s32.totalorder %s71, %s73
      %p80 = scmp.eq.s32.totalorder %s21, 1
      %p81 = por %p79, %p80
      %p82 = scmp.ne.s32.totalorder %s73, %s74
      %p83 = scmp.eq.s32.totalorder %s21, 0
      %p84 = por %p82, %p83
      %p85 = scmp.ne.s32.totalorder %s73, %s74
      %p86 = scmp.eq.s32.totalorder %s22, 1
      %p87 = por %p85, %p86
      %p89 = scmp.ne.s32.totalorder %s74, %s88
      %p90 = scmp.eq.s32.totalorder %s22, 0
      %p91 = por %p89, %p90
      %s93 = sadd.s32 %s92, 1
      %p96 = scmp.eq.s32.totalorder %s16, 1
      %p97 = scmp.ne.s32.totalorder %s92, %s94
      %p98 = scmp.eq.s32.totalorder %s16, 0
      %p99 = por %p97, %p98
      %p100 = scmp.ne.s32.totalorder %s92, %s94
      %p101 = scmp.eq.s32.totalorder %s21, 1
      %p102 = por %p100, %p101
      %p103 = scmp.ne.s32.totalorder %s94, %s95
      %p104 = scmp.eq.s32.totalorder %s21, 0
      %p105 = por %p103, %p104
      %p106 = scmp.ne.s32.totalorder %s94, %s95
      %p107 = scmp.eq.s32.totalorder %s22, 1
      %p108 = por %p106, %p107
      %p110 = scmp.ne.s32.totalorder %s95, %s109
      %p111 = scmp.eq.s32.totalorder %s22, 0
      %p112 = por %p110, %p111
      %s113 = ssub.s32 %s16, %s23
      %p114 = scmp.eq.s32.totalorder %s113, 0
      %s116 = sadd.s32 %s115, 1
      %s117 = scalar_select %p114, %s115, %s116
      %p120 = pneg %p114
      %p121 = scmp.eq.s32.totalorder %s16, 1
      %p122 = por %p120, %p121
      %p123 = scmp.ne.s32.totalorder %s115, %s118
      %p124 = scmp.eq.s32.totalorder %s16, 0
      %p125 = por %p123, %p124
      %p126 = scmp.ne.s32.totalorder %s115, %s118
      %p127 = scmp.eq.s32.totalorder %s21, 1
      %p128 = por %p126, %p127
      %p129 = scmp.ne.s32.totalorder %s118, %s119
      %p130 = scmp.eq.s32.totalorder %s21, 0
      %p131 = por %p129, %p130
      %p132 = scmp.ne.s32.totalorder %s118, %s119
      %p133 = scmp.eq.s32.totalorder %s22, 1
      %p134 = por %p132, %p133
      %p136 = scmp.ne.s32.totalorder %s119, %s135
      %p137 = scmp.eq.s32.totalorder %s22, 0
      %p138 = por %p136, %p137
      %p139 = scmp.le.s32.totalorder 1, %s16
      %p140 = scmp.lt.s32.totalorder %s16, 3
      %p141 = pnand %p139, %p140
      %p142 = pneg %p141
      // Predicated region
      $region9: #{tpu_custom_call.1} parent=5 // pred_check
        _
      $region10: #{tpu_custom_call.1} parent=5 // pred_check_branch
        %144 = sbr.rel (%p141) target = $region12
      $region11: #{tpu_custom_call.1} parent=5 // pred_region
        %s145 = ssub.s32 %s16, 1
        // Predicated region
        $region13: #{tpu_custom_call.1} parent=11 // pred_check
          %p146 = pneg %p63
        $region14: #{tpu_custom_call.1} parent=11 // pred_check_branch
          %148 = sbr.rel (%p146) target = $region16
        $region15: #{tpu_custom_call.1} parent=11 // pred_region
          _
        $region16: #{tpu_custom_call.1} parent=11 // pred_fallthru
          _
        // Predicated region
        $region17: #{tpu_custom_call.1} parent=11 // pred_check
          %p149 = pneg %p84
        $region18: #{tpu_custom_call.1} parent=11 // pred_check_branch
          %151 = sbr.rel (%p149) target = $region20
        $region19: #{tpu_custom_call.1} parent=11 // pred_region
          _
        $region20: #{tpu_custom_call.1} parent=11 // pred_fallthru
          _
        // Predicated region
        $region21: #{tpu_custom_call.1} parent=11 // pred_check
          %p152 = pneg %p105
        $region22: #{tpu_custom_call.1} parent=11 // pred_check_branch
          %154 = sbr.rel (%p152) target = $region24
        $region23: #{tpu_custom_call.1} parent=11 // pred_region
          _
        $region24: #{tpu_custom_call.1} parent=11 // pred_fallthru
          _
      $region12: #{tpu_custom_call.1} parent=5 // pred_fallthru
        _
      %p155 = scmp.lt.s32.totalorder %s16, 2
      // Predicated region
      $region25: #{tpu_custom_call.1} parent=5 // pred_check
        %p156 = pneg %p155
      $region26: #{tpu_custom_call.1} parent=5 // pred_check_branch
        %158 = sbr.rel (%p156) target = $region28
      $region27: #{tpu_custom_call.1} parent=5 // pred_region
        // Predicated region
        $region29: #{tpu_custom_call.1} parent=27 // pred_check
          %p159 = pneg %p36
        $region30: #{tpu_custom_call.1} parent=27 // pred_check_branch
          %161 = sbr.rel (%p159) target = $region32
        $region31: #{tpu_custom_call.1} parent=27 // pred_region
          %s162 = sand.u32 %s26, 1
          %s163 = scalar_lea.sflag [#allocation3], %s162
          %s164 = sand.u32 %s26, 1
          %s165 = smul.addr %s164, 16
          %s166 = scalar_lea.vmem [#allocation2], %s165
          %s168 = ssub.s32 256, 256
          %169 = vsyncadd %s163, %s168
          %s170 = smul.addr %s16, 2
          %s171 = smul.addr %s170, 128
          %s172 = scalar_lea.hbm %s0, %s171
          %s174 = sshll.u32 %s166, 4
          %s175 = int_to_ptr.vmem [resolvable:$true] %s174
          %177 = dma.hbm_to_vmem [thread:$0]  %s172, 256, %s175, %s163
        $region32: #{tpu_custom_call.1} parent=27 // pred_fallthru
          _
      $region28: #{tpu_custom_call.1} parent=5 // pred_fallthru
        _
      %p178 = scmp.le.s32.totalorder 1, %s16
      %p179 = scmp.lt.s32.totalorder %s16, 3
      %p180 = pnand %p178, %p179
      %p181 = pneg %p180
      // Predicated region
      $region33: #{tpu_custom_call.1} parent=5 // pred_check
        _
      $region34: #{tpu_custom_call.1} parent=5 // pred_check_branch
        %183 = sbr.rel (%p180) target = $region36
      $region35: #{tpu_custom_call.1} parent=5 // pred_region
        %s184 = ssub.s32 %s16, 1
        %s185 = sand.u32 %s29, 1
        %s186 = scalar_lea.sflag [#allocation3], %s185
        %s187 = sand.u32 %s29, 1
        %s188 = smul.addr %s187, 16
        %s189 = scalar_lea.vmem [#allocation2], %s188
        // Predicated region
        $region37: #{tpu_custom_call.1} parent=35 // pred_check
          %p190 = pneg %p42
        $region38: #{tpu_custom_call.1} parent=35 // pred_check_branch
          %192 = sbr.rel (%p190) target = $region40
        $region39: #{tpu_custom_call.1} parent=35 // pred_region
          %193 = dma.done %s186, 256
        $region40: #{tpu_custom_call.1} parent=35 // pred_fallthru
          _
        %s194 = sand.u32 %s29, 1
        %s195 = scalar_lea.sflag [#allocation3], %s194
        %s196 = sand.u32 %s29, 1
        %s197 = smul.addr %s196, 16
        %s198 = scalar_lea.vmem [#allocation2], %s197
        %p199 = pneg %p42
        %p200 = pneg %p39
        %p201 = pneg %p63
        %p202 = pneg %p60
        %p203 = pneg %p84
        %p204 = pneg %p81
        %p205 = pneg %p105
        %p206 = pneg %p102
        %p207 = pneg %p131
        %p208 = pneg %p128
        %s209 = sand.u32 %s118, 1
        %s210 = scalar_lea.sflag [#allocation4], %s209
        %s211 = sand.u32 %s118, 1
        %s212 = smul.addr %s211, 16
        %s213 = scalar_lea.vmem [#allocation5], %s212
        %v214 = vld [vmem:[%s189] sm:$0xff]
        %v215 = vld [vmem:[%s189 + $0x8] sm:$0xff]
        %v216 = vld [vmem:[%s3] sm:$0x77]
        %219 = vrot.lane.b32.xlu0 %v214, 17
        %v220 = vpop.permute.xlu0 %219
        %221 = vrot.lane.b32.xlu0 %v215, 17
        %v222 = vpop.permute.xlu0 %221
        %vm223 = vcmask 138240
        %v224 = vsel %vm223, %v220, %v222
        %v228 = vsel %vm223, 0.0, %v220
        %v229 = vsel %vm223, %v222, 0.0
        %v231 = vlaneseq
        %v232 = vshrl.u32 %v231, 7
        %v233 = vsub.s32 0, %v232
        %v234 = vrot.slane %v216, %v233
        %v235 = vlaneseq
        %v236 = vshrl.u32 %v235, 7
        %v237 = vsub.s32 4, %v236
        %v238 = vrot.slane %v216, %v237
        %v241 = vlaneseq
        %v242 = vshrl.u32 %v241, 7
        %v243 = vsub.s32 0, %v242
        %v244 = vrot.slane %v234, %v243
        %v245 = vlaneseq
        %v246 = vshrl.u32 %v245, 7
        %v247 = vsub.s32 0, %v246
        %v248 = vrot.slane %v238, %v247
        %v249 = vmul.f32 %v228, %v244
        %v250 = vmul.f32 %v224, %v248
        %v251 = vlaneseq
        %v252 = vshrl.u32 %v251, 7
        %v253 = vsub.s32 2, %v252
        %v254 = vrot.slane %v216, %v253
        %v255 = vlaneseq
        %v256 = vshrl.u32 %v255, 7
        %v257 = vsub.s32 6, %v256
        %v258 = vrot.slane %v216, %v257
        %v261 = vlaneseq
        %v262 = vshrl.u32 %v261, 7
        %v263 = vsub.s32 2, %v262
        %v264 = vrot.slane %v254, %v263
        %v265 = vlaneseq
        %v266 = vshrl.u32 %v265, 7
        %v267 = vsub.s32 2, %v266
        %v268 = vrot.slane %v258, %v267
        %271 = vrot.lane.b32.xlu0 %v264, 2
        %v272 = vpop.permute.xlu0 %271
        %273 = vrot.lane.b32.xlu0 %v268, 2
        %v274 = vpop.permute.xlu0 %273
        %vm275 = vcmask 15360
        %v276 = vsel %vm275, %v272, %v274
        %v280 = vmul.f32 %v228, %v272
        %v281 = vmul.f32 %v224, %v276
        %v282 = vmul.f32 %v229, %v274
        %285 = vrot.lane.b32.xlu0 %v244, 16
        %v286 = vpop.permute.xlu0 %285
        %287 = vrot.lane.b32.xlu0 %v248, 16
        %v288 = vpop.permute.xlu0 %287
        %vm289 = vcmask 130048
        %v290 = vsel %vm289, %v286, %v288
        %v294 = vmul.f32 %v228, %v286
        %v295 = vmul.f32 %v224, %v290
        %v296 = vmul.f32 %v229, %v288
        %297 = vrot.lane.b32.xlu0 %v264, 18
        %v298 = vpop.permute.xlu0 %297
        %299 = vrot.lane.b32.xlu0 %v268, 18
        %v300 = vpop.permute.xlu0 %299
        %vm301 = vcmask 146432
        %v302 = vsel %vm301, %v298, %v300
        %v306 = vmul.f32 %v228, %v298
        %v307 = vmul.f32 %v224, %v302
        %v308 = vmul.f32 %v229, %v300
        %309 = vrot.lane.b32.xlu0 %v244, 32
        %v310 = vpop.permute.xlu0 %309
        %311 = vrot.lane.b32.xlu0 %v248, 32
        %v312 = vpop.permute.xlu0 %311
        %vm313 = vcmask 261120
        %v314 = vsel %vm313, %v310, %v312
        %v318 = vmul.f32 %v228, %v310
        %v319 = vmul.f32 %v224, %v314
        %v320 = vmul.f32 %v229, %v312
        %321 = vrot.lane.b32.xlu0 %v264, 34
        %v322 = vpop.permute.xlu0 %321
        %323 = vrot.lane.b32.xlu0 %v268, 34
        %v324 = vpop.permute.xlu0 %323
        %vm325 = vcmask 277504
        %v326 = vsel %vm325, %v322, %v324
        %v330 = vmul.f32 %v228, %v322
        %v331 = vmul.f32 %v224, %v326
        %v332 = vmul.f32 %v229, %v324
        %335 = vrot.lane.b32.xlu0 %v228, 127
        %v336 = vpop.permute.xlu0 %335
        %337 = vrot.lane.b32.xlu0 %v224, 127
        %v338 = vpop.permute.xlu0 %337
        %339 = vrot.lane.b32.xlu0 %v229, 127
        %v340 = vpop.permute.xlu0 %339
        %vm341 = vcmask 1039360
        %v342 = vsel %vm341, %v336, %v338
        %v343 = vsel %vm341, %v338, %v340
        %349 = vrot.lane.b32.xlu0 %v280, 126
        %v350 = vpop.permute.xlu0 %349
        %351 = vrot.lane.b32.xlu0 %v281, 126
        %v352 = vpop.permute.xlu0 %351
        %353 = vrot.lane.b32.xlu0 %v282, 126
        %v354 = vpop.permute.xlu0 %353
        %vm355 = vcmask 1031168
        %v356 = vsel %vm355, %v350, %v352
        %v357 = vsel %vm355, %v352, %v354
        %363 = vrot.lane.b32.xlu0 %v294, 112
        %v364 = vpop.permute.xlu0 %363
        %365 = vrot.lane.b32.xlu0 %v295, 112
        %v366 = vpop.permute.xlu0 %365
        %367 = vrot.lane.b32.xlu0 %v296, 112
        %v368 = vpop.permute.xlu0 %367
        %vm369 = vcmask 916480
        %v370 = vsel %vm369, %v364, %v366
        %v371 = vsel %vm369, %v366, %v368
        %374 = vrot.lane.b32.xlu0 %v228, 111
        %v375 = vpop.permute.xlu0 %374
        %376 = vrot.lane.b32.xlu0 %v224, 111
        %v377 = vpop.permute.xlu0 %376
        %378 = vrot.lane.b32.xlu0 %v229, 111
        %v379 = vpop.permute.xlu0 %378
        %vm380 = vcmask 908288
        %v381 = vsel %vm380, %v375, %v377
        %v382 = vsel %vm380, %v377, %v379
        %388 = vrot.lane.b32.xlu0 %v306, 110
        %v389 = vpop.permute.xlu0 %388
        %390 = vrot.lane.b32.xlu0 %v307, 110
        %v391 = vpop.permute.xlu0 %390
        %392 = vrot.lane.b32.xlu0 %v308, 110
        %v393 = vpop.permute.xlu0 %392
        %vm394 = vcmask 900096
        %v395 = vsel %vm394, %v389, %v391
        %v396 = vsel %vm394, %v391, %v393
        %402 = vrot.lane.b32.xlu0 %v318, 96
        %v403 = vpop.permute.xlu0 %402
        %404 = vrot.lane.b32.xlu0 %v319, 96
        %v405 = vpop.permute.xlu0 %404
        %406 = vrot.lane.b32.xlu0 %v320, 96
        %v407 = vpop.permute.xlu0 %406
        %vm408 = vcmask 785408
        %v409 = vsel %vm408, %v403, %v405
        %v410 = vsel %vm408, %v405, %v407
        %413 = vrot.lane.b32.xlu0 %v228, 95
        %v414 = vpop.permute.xlu0 %413
        %415 = vrot.lane.b32.xlu0 %v224, 95
        %v416 = vpop.permute.xlu0 %415
        %417 = vrot.lane.b32.xlu0 %v229, 95
        %v418 = vpop.permute.xlu0 %417
        %vm419 = vcmask 777216
        %v420 = vsel %vm419, %v414, %v416
        %v421 = vsel %vm419, %v416, %v418
        %427 = vrot.lane.b32.xlu0 %v330, 94
        %v428 = vpop.permute.xlu0 %427
        %429 = vrot.lane.b32.xlu0 %v331, 94
        %v430 = vpop.permute.xlu0 %429
        %431 = vrot.lane.b32.xlu0 %v332, 94
        %v432 = vpop.permute.xlu0 %431
        %vm433 = vcmask 769024
        %v434 = vsel %vm433, %v428, %v430
        %v435 = vsel %vm433, %v430, %v432
        %v438 = vld [vmem:[%s1] sm:$0xff]
        %v439 = vld [vmem:[%s2] sm:$0xff]
        %441 = vset.pattern.permute.xlu0 0
        %442 = vperm.xlu0 %441, %v439
        %v443 = vpop.permute.xlu0 %442
        %vm445 = vcmask 588800
        %v447 = vsel %vm445, %v438, 0
        %449 = vmatprep.subr.mxu0 %v250
        %450 = vmatpush1.msra.mxu0 %v249
        %451 = vmatprep.subr.mxu0 %v343
        %452 = vmatpush1.msra.mxu0 %v342
        %453 = vmatprep.subr.mxu0 %v357
        %454 = vmatpush1.msra.mxu0 %v356
        %455 = vmatprep.subr.mxu0 %v371
        %456 = vmatpush1.msra.mxu0 %v370
        %457 = vmatprep.subr.mxu0 %v382
        %458 = vmatpush1.msra.mxu0 %v381
        %459 = vmatprep.subr.mxu0 %v396
        %460 = vmatpush1.msra.mxu0 %v395
        %461 = vmatprep.subr.mxu0 %v410
        %462 = vmatpush1.msra.mxu0 %v409
        %463 = vmatprep.subr.mxu0 %v421
        %464 = vmatpush1.msra.mxu0 %v420
        %465 = vmatprep.subr.mxu0 %v435
        %466 = vmatpush1.msra.mxu0 %v434
        %467 = vmatprep.subr.mxu0 0.0
        %468 = vmatpush1.msra.mxu0 0.0
        %469 = vmatprep.subr.mxu0 0.0
        %470 = vmatpush1.msra.mxu0 0.0
        %471 = vmatprep.subr.mxu0 0.0
        %472 = vmatpush1.msra.mxu0 0.0
        %473 = vmatprep.subr.mxu0 0.0
        %474 = vmatpush1.msra.mxu0 0.0
        %475 = vmatprep.subr.mxu0 0.0
        %476 = vmatpush1.msra.mxu0 0.0
        %477 = vmatprep.subr.mxu0 0.0
        %478 = vmatpush1.msra.mxu0 0.0
        %479 = vmatprep.subr.mxu0 0.0
        %480 = vmatpush1.msra.mxu0 0.0
        %481 = vmatprep.subr.mxu0 0.0
        %482 = vmatpush1.msra.mxu0 0.0
        %483 = vmatprep.subr.mxu0 0.0
        %484 = vmatpush1.msra.mxu0 0.0
        %485 = vmatprep.subr.mxu0 0.0
        %486 = vmatpush1.msra.mxu0 0.0
        %487 = vmatprep.subr.mxu0 0.0
        %488 = vmatpush1.msra.mxu0 0.0
        %489 = vmatprep.subr.mxu0 0.0
        %490 = vmatpush1.msra.mxu0 0.0
        %491 = vmatprep.subr.mxu0 0.0
        %492 = vmatpush1.msra.mxu0 0.0
        %493 = vmatprep.subr.mxu0 0.0
        %494 = vmatpush1.msra.mxu0 0.0
        %495 = vmatprep.subr.mxu0 0.0
        %496 = vmatpush1.msra.mxu0 0.0
        %497 = vmatprep.subr.mxu0 0.0
        %498 = vmatpush1.msra.mxu0 0.0
        %499 = vmatprep.subr.mxu0 0.0
        %500 = vmatpush1.msra.mxu0 0.0
        %501 = vmatprep.subr.mxu0 0.0
        %502 = vmatpush1.msra.mxu0 0.0
        %503 = vmatprep.subr.mxu0 0.0
        %504 = vmatpush1.msra.mxu0 0.0
        %505 = vmatprep.subr.mxu0 0.0
        %506 = vmatpush1.msra.mxu0 0.0
        %507 = vmatprep.subr.mxu0 0.0
        %508 = vmatpush1.msra.mxu0 0.0
        %509 = vmatprep.subr.mxu0 0.0
        %510 = vmatpush1.msra.mxu0 0.0
        %511 = vmatprep.subr.mxu0 0.0
        %512 = vmatpush1.msra.mxu0 0.0
        %513 = vmatprep.mubr.f32.mxu0 0.0
        %514 = vmatmul.mubr.f32.gmra.mrb[0].mxu0 %v447
        %v515 = vpop.f32.mrb[0].mxu0
        %v516 = vadd.f32 %v443, %v515
        %v517 = vpop.f32.mrb[0].mxu0
        %v518 = vadd.f32 %v443, %v517
        %519 = vdwg.mxu0
        %v520 = vlaneseq
        %v521 = vshrl.u32 %v520, 7
        %vm522 = vcmp.lt.s32.totalorder %v521, 3
        %v523 = vtanh.pop %v516
        %v524 = vtanh.pop %v518
        %v525 = vadd.f32 %v523, %v214
        %v526 = vadd.f32 %v524, %v215
        %vm527 = vcmp.ge.f32.partialorder %v516, 0.0
        %vm528 = vcmp.ge.f32.partialorder %v518, 0.0
        %v529 = vmul.f32 %v516, 0.01
        %v530 = vmul.f32 %v518, 0.01
        %v531 = vsel %vm527, %v516, %v529
        %v532 = vsel %vm528, %v518, %v530
        %v533 = vsel %vm522, %v525, %v531
        %v534 = vsel %vm522, %v526, %v532
        %535 = vst [vmem:[%s213] sm:$0xff] %v533
        %536 = vst [vmem:[%s213 + $0x8] sm:$0xff] %v534
        %s537 = sand.u32 %s118, 1
        %s538 = scalar_lea.sflag [#allocation4], %s537
        %s539 = sand.u32 %s118, 1
        %s540 = smul.addr %s539, 16
        %s541 = scalar_lea.vmem [#allocation5], %s540
        // Predicated region
        $region41: #{tpu_custom_call.1} parent=35 // pred_check
          %p542 = pneg %p128
        $region42: #{tpu_custom_call.1} parent=35 // pred_check_branch
          %544 = sbr.rel (%p542) target = $region44
        $region43: #{tpu_custom_call.1} parent=35 // pred_region
          %s546 = ssub.s32 256, 256
          %547 = vsyncadd %s538, %s546
          %s548 = smul.addr %s21, 2
          %s549 = smul.addr %s548, 128
          %s550 = scalar_lea.hbm %s4, %s549
          %s552 = sshll.u32 %s541, 4
          %s553 = int_to_ptr.vmem [resolvable:$true] %s552
          %555 = dma.vmem_to_hbm [thread:$0]  %s553, 256, %s550, %s538
        $region44: #{tpu_custom_call.1} parent=35 // pred_fallthru
          _
      $region36: #{tpu_custom_call.1} parent=5 // pred_fallthru
        _
      %p556 = scmp.le.s32.totalorder 2, %s16
      // Predicated region
      $region45: #{tpu_custom_call.1} parent=5 // pred_check
        %p557 = pneg %p556
      $region46: #{tpu_custom_call.1} parent=5 // pred_check_branch
        %559 = sbr.rel (%p557) target = $region48
      $region47: #{tpu_custom_call.1} parent=5 // pred_region
        %s560 = ssub.s32 %s16, 2
        // Predicated region
        $region49: #{tpu_custom_call.1} parent=47 // pred_check
          %p561 = pneg %p134
        $region50: #{tpu_custom_call.1} parent=47 // pred_check_branch
          %563 = sbr.rel (%p561) target = $region52
        $region51: #{tpu_custom_call.1} parent=47 // pred_region
          %s564 = sand.u32 %s119, 1
          %s565 = scalar_lea.sflag [#allocation4], %s564
          %s566 = sand.u32 %s119, 1
          %s567 = smul.addr %s566, 16
          %s568 = scalar_lea.vmem [#allocation5], %s567
          %569 = dma.done %s565, 256
        $region52: #{tpu_custom_call.1} parent=47 // pred_fallthru
          _
      $region48: #{tpu_custom_call.1} parent=5 // pred_fallthru
        _
    $region6: #{tpu_custom_call.1} parent=1 // loop_footer
      %s20 = sadd.s32 1, %s16
    $region7: #{tpu_custom_call.1} parent=1 // loop_footer_branch
      %15 = sbr.rel target = $region3
    $region8: #{tpu_custom_call.1} parent=1 // loop_exit
      _
    %570 = vsyncpa [#allocation3], 1
    %s571 = scalar_lea.sflag [#allocation3], 1
    %572 = vsyncpa %s571, 1
    %573 = vsyncpa [#allocation4], 1
    %s574 = scalar_lea.sflag [#allocation4], 1
    %575 = vsyncpa %s574, 1

</llo_original>
